<compile_context>
chip_gen: v6e
topology: v6e:2x2x1
jax: 0.10.0
libtpu: 0.0.40
codegen_flags: <defaults>
</compile_context>

<pallas_src>
import functools

import jax
import jax.numpy as jnp
from jax.experimental import pallas as pl
from jax.experimental.pallas import tpu as pltpu

EPS = 1e-5


def resnet_block_kernel(
    x_ref,            # (1, C_in, HWp)   current sample (f32)
    w1_ref,           # (C_out, C_in)    left conv1 weight (f32)
    w2_ref,           # (C_out, C_out)   left conv2 weight (f32)
    wr_ref,           # (C_out, C_in)    right/residual conv weight (f32)
    pv_ref,           # (C_out, 8)       packed [b1,g1,be1,b2,g2,be2,br,0] (f32)
    o_ref,            # (1, C_out, HWp)  current sample
    *scratch,
    N, HW, HWp, resident, mxu_dtype,
):
    if resident:
        # y_buf: (N, C_out, HWp) per-sample left-branch slab (mxu_dtype)
        y_buf, acc_ref, scale_ref = scratch
        stats_ref = None
    else:
        # stats: (4*N, C_out, 1) per-sample IN stats [m1 | rstd1 | m2 | rstd2]
        stats_ref, acc_ref, scale_ref = scratch
        y_buf = None

    p = pl.program_id(0)          # phase
    n = pl.program_id(1)          # sample
    f32 = jnp.float32

    # Packed per-channel vectors (one constant DMA instead of seven).
    pv = pv_ref[...]
    b1, g1, be1 = pv[:, 0:1], pv[:, 1:2], pv[:, 2:3]
    b2, g2, be2 = pv[:, 3:4], pv[:, 4:5], pv[:, 5:6]
    br = pv[:, 6:7]

    # Lane mask only exists when HW was padded (static condition -> no overhead
    # for already-128-aligned spatial sizes).
    if HWp != HW:
        lane = jax.lax.broadcasted_iota(jnp.int32, (1, HWp), 1)
        lane_mask = lane < HW
    else:
        lane_mask = None
    inv_hw = 1.0 / HW

    def conv(w_ref, b, inp):
        # 1x1 conv == channel matmul; bias (C_out, 1) broadcasts over lanes.
        # Operands cast to mxu_dtype (no-op for f32), f32 accumulation.
        w = w_ref[...].astype(mxu_dtype)
        return jnp.dot(w, inp.astype(mxu_dtype), preferred_element_type=f32) + b

    def in_stats(h):
        # Single-pass IN stats over the true HW lanes: v = E[h^2] - m^2
        # (post-conv activations are unit-scale, cancellation is negligible).
        hm = h if lane_mask is None else jnp.where(lane_mask, h, 0.0)
        m = jnp.sum(hm, axis=1, keepdims=True) * inv_hw
        q = jnp.sum(hm * hm, axis=1, keepdims=True) * inv_hw
        v = jnp.maximum(q - m * m, 0.0)
        return m, v

    @pl.when((p == 0) & (n == 0))
    def _init():
        acc_ref[...] = jnp.zeros_like(acc_ref)

    # Fused training-mode BatchNorm scales, hoisted: computed once per phase
    # (mean is exactly 0 after IN, variance is the accumulated scalar / N).
    @pl.when((p == 1) & (n == 0))
    def _scale1():
        var = acc_ref[0] * (1.0 / N)
        scale_ref[0] = jax.lax.rsqrt(var + EPS) * g1

    @pl.when((p == 2) & (n == 0))
    def _scale2():
        var = acc_ref[1] * (1.0 / N)
        scale_ref[1] = jax.lax.rsqrt(var + EPS) * g2

    def conv1_in1(x):
        # Recompute-mode helper: conv1 + IN1 with stats stored in phase 0.
        h1 = conv(w1_ref, b1, x)
        return (h1 - stats_ref[0 * N + n]) * stats_ref[1 * N + n]

    @pl.when(p == 0)
    def _phase0():
        x = x_ref[0].astype(f32)                      # (C_in, HWp)
        h1 = conv(w1_ref, b1, x)
        m1, v1 = in_stats(h1)
        acc_ref[0] = acc_ref[0] + v1 / (v1 + EPS)     # BN1 variance contribution
        r1 = jax.lax.rsqrt(v1 + EPS)
        if resident:
            y_buf[n] = ((h1 - m1) * r1).astype(y_buf.dtype)
        else:
            stats_ref[0 * N + n] = m1
            stats_ref[1 * N + n] = r1

    @pl.when(p == 1)
    def _phase1():
        if resident:
            y1 = y_buf[n].astype(f32)
        else:
            y1 = conv1_in1(x_ref[0].astype(f32))
        z = jnp.maximum(y1 * scale_ref[0] + be1, 0.0)  # BN1 + ReLU
        h2 = conv(w2_ref, b2, z)
        m2, v2 = in_stats(h2)
        acc_ref[1] = acc_ref[1] + v2 / (v2 + EPS)      # BN2 variance contribution
        r2 = jax.lax.rsqrt(v2 + EPS)
        if resident:
            y_buf[n] = ((h2 - m2) * r2).astype(y_buf.dtype)
        else:
            stats_ref[2 * N + n] = m2
            stats_ref[3 * N + n] = r2

    @pl.when(p == 2)
    def _phase2():
        x = x_ref[0].astype(f32)
        x1 = conv(wr_ref, br, x)                       # residual branch
        if resident:
            y2 = y_buf[n].astype(f32)
        else:
            y1 = conv1_in1(x)
            z = jnp.maximum(y1 * scale_ref[0] + be1, 0.0)
            h2 = conv(w2_ref, b2, z)
            y2 = (h2 - stats_ref[2 * N + n]) * stats_ref[3 * N + n]
        out = y2 * scale_ref[1] + be2 + x1             # BN2 + residual add
        o_ref[0] = jnp.maximum(out, 0.0).astype(o_ref.dtype)


def resnet_block(x, params, *, compute_dtype=jnp.float32, force_recompute=False):
    """x: (N, C_in, H, W) float32 -> (N, C_out, H, W) float32."""
    N, C_in, H, W = x.shape
    HW = H * W
    HWp = ((HW + 127) // 128) * 128       # lane-dense blocks (pad spatial to 128)
    C_out = params["w1"].shape[0]

    x3 = x.reshape(N, C_in, HW)           # free reshape, no NCHW transpose
    if HWp != HW:
        x3 = jnp.pad(x3, ((0, 0), (0, 0), (0, HWp - HW)))

    # Pack the seven (C_out, 1) per-channel vectors into one constant block.
    pvec = jnp.concatenate(
        [params["b1"], params["g1"], params["be1"],
         params["b2"], params["g2"], params["be2"],
         params["br"], jnp.zeros((C_out, 1), jnp.float32)], axis=1)

    # Generation-aware VMEM budget (~96 MiB on v5e/v6e, ~32 MiB on v7x).
    try:
        info = pltpu.get_tpu_info()
        vmem_cap = int(getattr(info, "vmem_capacity_bytes", 64 * 1024 * 1024))
    except Exception:
        vmem_cap = 64 * 1024 * 1024
    vmem_limit = max(32 * 1024 * 1024, vmem_cap - 32 * 1024 * 1024)

    # Resident vs recompute schedule selection (static, trace-time).
    y_buf_bytes = N * C_out * HWp * jnp.dtype(compute_dtype).itemsize
    stream_bytes = 2 * (C_in + C_out) * HWp * 4        # double-buffered x / out blocks
    weight_bytes = (2 * C_out * C_in + C_out * C_out + 8 * C_out) * 4
    resident = (not force_recompute) and (
        y_buf_bytes + stream_bytes + weight_bytes + (1 << 20) <= int(0.75 * vmem_limit))

    if resident:
        # x needed in phases 0 and 2; phase 1 parks on block 0 (single re-DMA).
        x_map = lambda p, n: (jnp.where(p == 1, 0, n), 0, 0)
        scratch0 = pltpu.VMEM((N, C_out, HWp), compute_dtype)     # per-sample slab
    else:
        # x re-read in every phase; only tiny per-sample IN stats kept in VMEM.
        x_map = lambda p, n: (n, 0, 0)
        scratch0 = pltpu.VMEM((4 * N, C_out, 1), jnp.float32)     # m1|rstd1|m2|rstd2
    # Output produced only in phase 2; earlier phases stay parked on block 0 so
    # the block index only changes (and write-back only happens) in phase 2.
    o_map = lambda p, n: (jnp.where(p == 2, n, 0), 0, 0)
    const = lambda p, n: (0, 0)

    in_specs = [
        pl.BlockSpec((1, C_in, HWp), x_map),
        pl.BlockSpec((C_out, C_in), const),      # w1
        pl.BlockSpec((C_out, C_out), const),     # w2
        pl.BlockSpec((C_out, C_in), const),      # wr
        pl.BlockSpec((C_out, 8), const),         # packed per-channel vectors
    ]

    out3 = pl.pallas_call(
        functools.partial(resnet_block_kernel, N=N, HW=HW, HWp=HWp,
                          resident=resident, mxu_dtype=compute_dtype),
        out_shape=jax.ShapeDtypeStruct((N, C_out, HWp), x.dtype),
        grid_spec=pltpu.PrefetchScalarGridSpec(
            num_scalar_prefetch=0,
            grid=(3, N),
            in_specs=in_specs,
            out_specs=pl.BlockSpec((1, C_out, HWp), o_map),
            scratch_shapes=[
                scratch0,
                pltpu.VMEM((2, C_out, 1), jnp.float32),  # BN1/BN2 fused-variance acc
                pltpu.VMEM((2, C_out, 1), jnp.float32),  # hoisted BN scales
            ],
        ),
        compiler_params=pltpu.CompilerParams(
            # Phases and the BN accumulators couple both grid axes sequentially.
            dimension_semantics=("arbitrary", "arbitrary"),
            vmem_limit_bytes=vmem_limit,
        ),
    )(x3, params["w1"], params["w2"], params["wr"], pvec)

    if HWp != HW:
        out3 = out3[:, :, :HW]
    return out3.reshape(N, C_out, H, W)


def make_params(key, c_in, c_out):
    k = jax.random.split(key, 6)
    s1 = 1.0 / jnp.sqrt(c_in)
    s2 = 1.0 / jnp.sqrt(c_out)
    return {
        "wr": jax.random.uniform(k[0], (c_out, c_in), jnp.float32, -s1, s1),
        "br": jax.random.uniform(k[1], (c_out, 1), jnp.float32, -s1, s1),
        "w1": jax.random.uniform(k[2], (c_out, c_in), jnp.float32, -s1, s1),
        "b1": jax.random.uniform(k[3], (c_out, 1), jnp.float32, -s1, s1),
        "g1": jnp.ones((c_out, 1), jnp.float32),    # BatchNorm default affine init
        "be1": jnp.zeros((c_out, 1), jnp.float32),
        "w2": jax.random.uniform(k[4], (c_out, c_out), jnp.float32, -s2, s2),
        "b2": jax.random.uniform(k[5], (c_out, 1), jnp.float32, -s2, s2),
        "g2": jnp.ones((c_out, 1), jnp.float32),
        "be2": jnp.zeros((c_out, 1), jnp.float32),
    }


def resnet_block_ref(x, p):
    """Pure-JAX reference mirroring the PyTorch forward (NCHW, train-mode BN)."""
    def conv(w, b, y):
        return jnp.einsum("oi,nihw->nohw", w, y) + b[:, 0][None, :, None, None]

    def inorm(y):
        m = y.mean(axis=(2, 3), keepdims=True)
        v = ((y - m) ** 2).mean(axis=(2, 3), keepdims=True)
        return (y - m) / jnp.sqrt(v + EPS)

    def bnorm(y, g, be):
        m = y.mean(axis=(0, 2, 3), keepdims=True)
        v = ((y - m) ** 2).mean(axis=(0, 2, 3), keepdims=True)
        return (y - m) / jnp.sqrt(v + EPS) * g[:, 0][None, :, None, None] \
            + be[:, 0][None, :, None, None]

    x1 = conv(p["wr"], p["br"], x)
    out = conv(p["w1"], p["b1"], x)
    out = bnorm(inorm(out), p["g1"], p["be1"])
    out = jnp.maximum(out, 0.0)
    out = conv(p["w2"], p["b2"], out)
    out = bnorm(inorm(out), p["g2"], p["be2"])
    return jnp.maximum(out + x1, 0.0)


if __name__ == "__main__":
    N, C_IN, C_OUT, H, W = 2, 4, 8, 16, 16

    key = jax.random.PRNGKey(0)
    kx, kp = jax.random.split(key)
    x = jax.random.normal(kx, (N, C_IN, H, W), jnp.float32)
    params = make_params(kp, C_IN, C_OUT)

    ref = resnet_block_ref(x, params)

    # 1) Default schedule: VMEM-resident intermediate, f32 MXU operands.
    out = jax.block_until_ready(resnet_block(x, params))
    assert out.shape == (N, C_OUT, H, W)
    assert jnp.allclose(out, ref, rtol=1e-3, atol=1e-3), "resident/f32 mismatch"

    # 2) HBM-lean recompute schedule (automatic fallback for large N*C_out*HW,
    #    e.g. v7x's 64 MiB VMEM) -- exercised explicitly here.
    out_rc = jax.block_until_ready(resnet_block(x, params, force_recompute=True))
    assert jnp.allclose(out_rc, ref, rtol=1e-3, atol=1e-3), "recompute mismatch"

    # 3) bf16 MXU operands + bf16 resident slab; bf16 rounding through two
    #    conv+InstanceNorm stages -> validated at a bf16-appropriate tolerance.
    out_bf = jax.block_until_ready(
        resnet_block(x, params, compute_dtype=jnp.bfloat16))
    assert jnp.allclose(out_bf, ref, rtol=5e-2, atol=5e-2), "bf16 mismatch"

    print("KERNEL_OK")
</pallas_src>

<mosaic_0001>
module attributes {stable_mosaic.version = 11 : i64} {
  func.func @resnet_block_kernel(%arg0: i32, %arg1: i32, %arg2: memref<1x4x256xf32, #tpu.memory_space<vmem>>, %arg3: memref<8x4xf32, #tpu.memory_space<vmem>>, %arg4: memref<8x8xf32, #tpu.memory_space<vmem>>, %arg5: memref<8x4xf32, #tpu.memory_space<vmem>>, %arg6: memref<8x8xf32, #tpu.memory_space<vmem>>, %arg7: memref<1x8x256xf32, #tpu.memory_space<vmem>>, %arg8: memref<2x8x256xf32, #tpu.memory_space<vmem>>, %arg9: memref<2x8x1xf32, #tpu.memory_space<vmem>>, %arg10: memref<2x8x1xf32, #tpu.memory_space<vmem>>) attributes {dimension_semantics = [#tpu.dimension_semantics<arbitrary>, #tpu.dimension_semantics<arbitrary>], iteration_bounds = array<i64: 3, 2>, scalar_prefetch = 0 : i64, scratch_operands = 3 : i64, tpu.core_type = #tpu.core_type<tc>, window_params = [{transform_indices = @transform_0, window_bounds = array<i64: 1, 4, 256>}, {pipeline_mode = #tpu.pipeline_mode<synchronous>, transform_indices = @transform_1, window_bounds = array<i64: 8, 4>}, {pipeline_mode = #tpu.pipeline_mode<synchronous>, transform_indices = @transform_2, window_bounds = array<i64: 8, 8>}, {pipeline_mode = #tpu.pipeline_mode<synchronous>, transform_indices = @transform_3, window_bounds = array<i64: 8, 4>}, {pipeline_mode = #tpu.pipeline_mode<synchronous>, transform_indices = @transform_4, window_bounds = array<i64: 8, 8>}, {transform_indices = @transform_5, window_bounds = array<i64: 1, 8, 256>}]} {
    %c0 = arith.constant 0 : index
    %c0_0 = arith.constant 0 : index
    %0 = vector.load %arg6[%c0, %c0_0] : memref<8x8xf32, #tpu.memory_space<vmem>>, vector<8x8xf32>
    %1 = vector.extract_strided_slice %0 {offsets = [0, 0], sizes = [8, 1], strides = [1, 1]} : vector<8x8xf32> to vector<8x1xf32>
    %2 = vector.extract_strided_slice %0 {offsets = [0, 1], sizes = [8, 1], strides = [1, 1]} : vector<8x8xf32> to vector<8x1xf32>
    %3 = vector.extract_strided_slice %0 {offsets = [0, 2], sizes = [8, 1], strides = [1, 1]} : vector<8x8xf32> to vector<8x1xf32>
    %4 = vector.extract_strided_slice %0 {offsets = [0, 3], sizes = [8, 1], strides = [1, 1]} : vector<8x8xf32> to vector<8x1xf32>
    %5 = vector.extract_strided_slice %0 {offsets = [0, 4], sizes = [8, 1], strides = [1, 1]} : vector<8x8xf32> to vector<8x1xf32>
    %6 = vector.extract_strided_slice %0 {offsets = [0, 5], sizes = [8, 1], strides = [1, 1]} : vector<8x8xf32> to vector<8x1xf32>
    %7 = vector.extract_strided_slice %0 {offsets = [0, 6], sizes = [8, 1], strides = [1, 1]} : vector<8x8xf32> to vector<8x1xf32>
    %c0_i32 = arith.constant 0 : i32
    %8 = arith.cmpi eq, %arg0, %c0_i32 : i32
    %c0_i32_1 = arith.constant 0 : i32
    %9 = arith.cmpi eq, %arg1, %c0_i32_1 : i32
    %10 = arith.andi %8, %9 : i1
    %11 = arith.extui %10 : i1 to i32
    %c0_i32_2 = arith.constant 0 : i32
    %12 = arith.cmpi ne, %11, %c0_i32_2 : i32
    scf.if %12 {
      %cst = arith.constant 0.000000e+00 : f32
      %32 = vector.broadcast %cst : f32 to vector<2x8x1xf32>
      %c0_13 = arith.constant 0 : index
      %c0_14 = arith.constant 0 : index
      %c0_15 = arith.constant 0 : index
      %33 = vector.load %arg9[%c0_13, %c0_14, %c0_15] : memref<2x8x1xf32, #tpu.memory_space<vmem>>, vector<2x8x1xf32>
      tpu.vector_store %arg9[%c0_13, %c0_14, %c0_15], %32 {strides = array<i32>} : memref<2x8x1xf32, #tpu.memory_space<vmem>>, vector<2x8x1xf32>,
    } else {
    }
    %c1_i32 = arith.constant 1 : i32
    %13 = arith.cmpi eq, %arg0, %c1_i32 : i32
    %c0_i32_3 = arith.constant 0 : i32
    %14 = arith.cmpi eq, %arg1, %c0_i32_3 : i32
    %15 = arith.andi %13, %14 : i1
    %16 = arith.extui %15 : i1 to i32
    %c0_i32_4 = arith.constant 0 : i32
    %17 = arith.cmpi ne, %16, %c0_i32_4 : i32
    scf.if %17 {
      %c0_13 = arith.constant 0 : index
      %c0_14 = arith.constant 0 : index
      %c0_15 = arith.constant 0 : index
      %32 = vector.load %arg9[%c0_13, %c0_14, %c0_15] : memref<2x8x1xf32, #tpu.memory_space<vmem>>, vector<1x8x1xf32>
      %33 = vector.shape_cast %32 : vector<1x8x1xf32> to vector<8x1xf32>
      %cst = arith.constant 5.000000e-01 : f32
      %34 = vector.broadcast %cst : f32 to vector<8x1xf32>
      %35 = arith.mulf %33, %34 : vector<8x1xf32>
      %cst_16 = arith.constant 9.99999974E-6 : f32
      %36 = vector.broadcast %cst_16 : f32 to vector<8x1xf32>
      %37 = arith.addf %35, %36 : vector<8x1xf32>
      %38 = math.rsqrt %37 : vector<8x1xf32>
      %39 = arith.mulf %38, %2 : vector<8x1xf32>
      %c0_17 = arith.constant 0 : index
      %c0_18 = arith.constant 0 : index
      %c0_19 = arith.constant 0 : index
      %40 = vector.load %arg10[%c0_17, %c0_18, %c0_19] : memref<2x8x1xf32, #tpu.memory_space<vmem>>, vector<1x8x1xf32>
      %41 = vector.shape_cast %40 : vector<1x8x1xf32> to vector<8x1xf32>
      %42 = vector.shape_cast %39 : vector<8x1xf32> to vector<1x8x1xf32>
      tpu.vector_store %arg10[%c0_17, %c0_18, %c0_19], %42 {strides = array<i32>} : memref<2x8x1xf32, #tpu.memory_space<vmem>>, vector<1x8x1xf32>,
    } else {
    }
    %c2_i32 = arith.constant 2 : i32
    %18 = arith.cmpi eq, %arg0, %c2_i32 : i32
    %c0_i32_5 = arith.constant 0 : i32
    %19 = arith.cmpi eq, %arg1, %c0_i32_5 : i32
    %20 = arith.andi %18, %19 : i1
    %21 = arith.extui %20 : i1 to i32
    %c0_i32_6 = arith.constant 0 : i32
    %22 = arith.cmpi ne, %21, %c0_i32_6 : i32
    scf.if %22 {
      %c1 = arith.constant 1 : index
      %c0_13 = arith.constant 0 : index
      %c0_14 = arith.constant 0 : index
      %32 = vector.load %arg9[%c1, %c0_13, %c0_14] : memref<2x8x1xf32, #tpu.memory_space<vmem>>, vector<1x8x1xf32>
      %33 = vector.shape_cast %32 : vector<1x8x1xf32> to vector<8x1xf32>
      %cst = arith.constant 5.000000e-01 : f32
      %34 = vector.broadcast %cst : f32 to vector<8x1xf32>
      %35 = arith.mulf %33, %34 : vector<8x1xf32>
      %cst_15 = arith.constant 9.99999974E-6 : f32
      %36 = vector.broadcast %cst_15 : f32 to vector<8x1xf32>
      %37 = arith.addf %35, %36 : vector<8x1xf32>
      %38 = math.rsqrt %37 : vector<8x1xf32>
      %39 = arith.mulf %38, %5 : vector<8x1xf32>
      %c1_16 = arith.constant 1 : index
      %c0_17 = arith.constant 0 : index
      %c0_18 = arith.constant 0 : index
      %40 = vector.load %arg10[%c1_16, %c0_17, %c0_18] : memref<2x8x1xf32, #tpu.memory_space<vmem>>, vector<1x8x1xf32>
      %41 = vector.shape_cast %40 : vector<1x8x1xf32> to vector<8x1xf32>
      %42 = vector.shape_cast %39 : vector<8x1xf32> to vector<1x8x1xf32>
      tpu.vector_store %arg10[%c1_16, %c0_17, %c0_18], %42 {strides = array<i32>} : memref<2x8x1xf32, #tpu.memory_space<vmem>>, vector<1x8x1xf32>,
    } else {
    }
    %c0_i32_7 = arith.constant 0 : i32
    %23 = arith.cmpi eq, %arg0, %c0_i32_7 : i32
    %24 = arith.extui %23 : i1 to i32
    %c0_i32_8 = arith.constant 0 : i32
    %25 = arith.cmpi ne, %24, %c0_i32_8 : i32
    scf.if %25 {
      %c0_13 = arith.constant 0 : index
      %c0_14 = arith.constant 0 : index
      %c0_15 = arith.constant 0 : index
      %32 = vector.load %arg2[%c0_13, %c0_14, %c0_15] : memref<1x4x256xf32, #tpu.memory_space<vmem>>, vector<1x4x256xf32>
      %33 = vector.shape_cast %32 : vector<1x4x256xf32> to vector<4x256xf32>
      %c0_16 = arith.constant 0 : index
      %c0_17 = arith.constant 0 : index
      %34 = vector.load %arg3[%c0_16, %c0_17] : memref<8x4xf32, #tpu.memory_space<vmem>>, vector<8x4xf32>
      %cst = arith.constant dense<0.000000e+00> : vector<8x256xf32>
      %35 = tpu.matmul %34, %33, %cst {dimension_numbers = #tpu.dot_dimension_numbers<[1], [0], [0], [1], [0, 0, 1, 1], [], []>} : vector<8x4xf32>, vector<4x256xf32>, vector<8x256xf32> -> vector<8x256xf32>
      %36 = vector.broadcast %1 : vector<8x1xf32> to vector<8x256xf32>
      %37 = arith.addf %35, %36 : vector<8x256xf32>
      %cst_18 = arith.constant dense<0.000000e+00> : vector<8xf32>
      %38 = vector.multi_reduction <add>, %37, %cst_18 [1] : vector<8x256xf32> to vector<8xf32>
      %39 = vector.shape_cast %38 : vector<8xf32> to vector<8x1xf32>
      %cst_19 = arith.constant 3.906250e-03 : f32
      %40 = vector.broadcast %cst_19 : f32 to vector<8x1xf32>
      %41 = arith.mulf %39, %40 : vector<8x1xf32>
      %42 = arith.mulf %37, %37 : vector<8x256xf32>
      %cst_20 = arith.constant dense<0.000000e+00> : vector<8xf32>
      %43 = vector.multi_reduction <add>, %42, %cst_20 [1] : vector<8x256xf32> to vector<8xf32>
      %44 = vector.shape_cast %43 : vector<8xf32> to vector<8x1xf32>
      %cst_21 = arith.constant 3.906250e-03 : f32
      %45 = vector.broadcast %cst_21 : f32 to vector<8x1xf32>
      %46 = arith.mulf %44, %45 : vector<8x1xf32>
      %47 = arith.mulf %41, %41 : vector<8x1xf32>
      %48 = arith.subf %46, %47 : vector<8x1xf32>
      %cst_22 = arith.constant 0.000000e+00 : f32
      %49 = vector.broadcast %cst_22 : f32 to vector<8x1xf32>
      %50 = arith.maximumf %48, %49 : vector<8x1xf32>
      %c0_23 = arith.constant 0 : index
      %c0_24 = arith.constant 0 : index
      %c0_25 = arith.constant 0 : index
      %51 = vector.load %arg9[%c0_23, %c0_24, %c0_25] : memref<2x8x1xf32, #tpu.memory_space<vmem>>, vector<1x8x1xf32>
      %52 = vector.shape_cast %51 : vector<1x8x1xf32> to vector<8x1xf32>
      %cst_26 = arith.constant 9.99999974E-6 : f32
      %53 = vector.broadcast %cst_26 : f32 to vector<8x1xf32>
      %54 = arith.addf %50, %53 : vector<8x1xf32>
      %55 = arith.divf %50, %54 : vector<8x1xf32>
      %56 = arith.addf %52, %55 : vector<8x1xf32>
      %c0_27 = arith.constant 0 : index
      %c0_28 = arith.constant 0 : index
      %c0_29 = arith.constant 0 : index
      %57 = vector.load %arg9[%c0_27, %c0_28, %c0_29] : memref<2x8x1xf32, #tpu.memory_space<vmem>>, vector<1x8x1xf32>
      %58 = vector.shape_cast %57 : vector<1x8x1xf32> to vector<8x1xf32>
      %59 = vector.shape_cast %56 : vector<8x1xf32> to vector<1x8x1xf32>
      tpu.vector_store %arg9[%c0_27, %c0_28, %c0_29], %59 {strides = array<i32>} : memref<2x8x1xf32, #tpu.memory_space<vmem>>, vector<1x8x1xf32>,
      %cst_30 = arith.constant 9.99999974E-6 : f32
      %60 = vector.broadcast %cst_30 : f32 to vector<8x1xf32>
      %61 = arith.addf %50, %60 : vector<8x1xf32>
      %62 = math.rsqrt %61 : vector<8x1xf32>
      %63 = vector.broadcast %41 : vector<8x1xf32> to vector<8x256xf32>
      %64 = arith.subf %37, %63 : vector<8x256xf32>
      %65 = vector.broadcast %62 : vector<8x1xf32> to vector<8x256xf32>
      %66 = arith.mulf %64, %65 : vector<8x256xf32>
      %67 = arith.index_cast %arg1 : i32 to index
      %c0_31 = arith.constant 0 : index
      %c0_32 = arith.constant 0 : index
      %68 = vector.load %arg8[%67, %c0_31, %c0_32] : memref<2x8x256xf32, #tpu.memory_space<vmem>>, vector<1x8x256xf32>
      %69 = vector.shape_cast %68 : vector<1x8x256xf32> to vector<8x256xf32>
      %70 = vector.shape_cast %66 : vector<8x256xf32> to vector<1x8x256xf32>
      tpu.vector_store %arg8[%67, %c0_31, %c0_32], %70 {strides = array<i32>} : memref<2x8x256xf32, #tpu.memory_space<vmem>>, vector<1x8x256xf32>,
    } else {
    }
    %c1_i32_9 = arith.constant 1 : i32
    %26 = arith.cmpi eq, %arg0, %c1_i32_9 : i32
    %27 = arith.extui %26 : i1 to i32
    %c0_i32_10 = arith.constant 0 : i32
    %28 = arith.cmpi ne, %27, %c0_i32_10 : i32
    scf.if %28 {
      %32 = arith.index_cast %arg1 : i32 to index
      %c0_13 = arith.constant 0 : index
      %c0_14 = arith.constant 0 : index
      %33 = vector.load %arg8[%32, %c0_13, %c0_14] : memref<2x8x256xf32, #tpu.memory_space<vmem>>, vector<1x8x256xf32>
      %34 = vector.shape_cast %33 : vector<1x8x256xf32> to vector<8x256xf32>
      %c0_15 = arith.constant 0 : index
      %c0_16 = arith.constant 0 : index
      %c0_17 = arith.constant 0 : index
      %35 = vector.load %arg10[%c0_15, %c0_16, %c0_17] : memref<2x8x1xf32, #tpu.memory_space<vmem>>, vector<1x8x1xf32>
      %36 = vector.shape_cast %35 : vector<1x8x1xf32> to vector<8x1xf32>
      %37 = vector.broadcast %36 : vector<8x1xf32> to vector<8x256xf32>
      %38 = arith.mulf %34, %37 : vector<8x256xf32>
      %39 = vector.broadcast %3 : vector<8x1xf32> to vector<8x256xf32>
      %40 = arith.addf %38, %39 : vector<8x256xf32>
      %cst = arith.constant 0.000000e+00 : f32
      %41 = vector.broadcast %cst : f32 to vector<8x256xf32>
      %42 = arith.maximumf %40, %41 : vector<8x256xf32>
      %c0_18 = arith.constant 0 : index
      %c0_19 = arith.constant 0 : index
      %43 = vector.load %arg4[%c0_18, %c0_19] : memref<8x8xf32, #tpu.memory_space<vmem>>, vector<8x8xf32>
      %cst_20 = arith.constant dense<0.000000e+00> : vector<8x256xf32>
      %44 = tpu.matmul %43, %42, %cst_20 {dimension_numbers = #tpu.dot_dimension_numbers<[1], [0], [0], [1], [0, 0, 1, 1], [], []>} : vector<8x8xf32>, vector<8x256xf32>, vector<8x256xf32> -> vector<8x256xf32>
      %45 = vector.broadcast %4 : vector<8x1xf32> to vector<8x256xf32>
      %46 = arith.addf %44, %45 : vector<8x256xf32>
      %cst_21 = arith.constant dense<0.000000e+00> : vector<8xf32>
      %47 = vector.multi_reduction <add>, %46, %cst_21 [1] : vector<8x256xf32> to vector<8xf32>
      %48 = vector.shape_cast %47 : vector<8xf32> to vector<8x1xf32>
      %cst_22 = arith.constant 3.906250e-03 : f32
      %49 = vector.broadcast %cst_22 : f32 to vector<8x1xf32>
      %50 = arith.mulf %48, %49 : vector<8x1xf32>
      %51 = arith.mulf %46, %46 : vector<8x256xf32>
      %cst_23 = arith.constant dense<0.000000e+00> : vector<8xf32>
      %52 = vector.multi_reduction <add>, %51, %cst_23 [1] : vector<8x256xf32> to vector<8xf32>
      %53 = vector.shape_cast %52 : vector<8xf32> to vector<8x1xf32>
      %cst_24 = arith.constant 3.906250e-03 : f32
      %54 = vector.broadcast %cst_24 : f32 to vector<8x1xf32>
      %55 = arith.mulf %53, %54 : vector<8x1xf32>
      %56 = arith.mulf %50, %50 : vector<8x1xf32>
      %57 = arith.subf %55, %56 : vector<8x1xf32>
      %cst_25 = arith.constant 0.000000e+00 : f32
      %58 = vector.broadcast %cst_25 : f32 to vector<8x1xf32>
      %59 = arith.maximumf %57, %58 : vector<8x1xf32>
      %c1 = arith.constant 1 : index
      %c0_26 = arith.constant 0 : index
      %c0_27 = arith.constant 0 : index
      %60 = vector.load %arg9[%c1, %c0_26, %c0_27] : memref<2x8x1xf32, #tpu.memory_space<vmem>>, vector<1x8x1xf32>
      %61 = vector.shape_cast %60 : vector<1x8x1xf32> to vector<8x1xf32>
      %cst_28 = arith.constant 9.99999974E-6 : f32
      %62 = vector.broadcast %cst_28 : f32 to vector<8x1xf32>
      %63 = arith.addf %59, %62 : vector<8x1xf32>
      %64 = arith.divf %59, %63 : vector<8x1xf32>
      %65 = arith.addf %61, %64 : vector<8x1xf32>
      %c1_29 = arith.constant 1 : index
      %c0_30 = arith.constant 0 : index
      %c0_31 = arith.constant 0 : index
      %66 = vector.load %arg9[%c1_29, %c0_30, %c0_31] : memref<2x8x1xf32, #tpu.memory_space<vmem>>, vector<1x8x1xf32>
      %67 = vector.shape_cast %66 : vector<1x8x1xf32> to vector<8x1xf32>
      %68 = vector.shape_cast %65 : vector<8x1xf32> to vector<1x8x1xf32>
      tpu.vector_store %arg9[%c1_29, %c0_30, %c0_31], %68 {strides = array<i32>} : memref<2x8x1xf32, #tpu.memory_space<vmem>>, vector<1x8x1xf32>,
      %cst_32 = arith.constant 9.99999974E-6 : f32
      %69 = vector.broadcast %cst_32 : f32 to vector<8x1xf32>
      %70 = arith.addf %59, %69 : vector<8x1xf32>
      %71 = math.rsqrt %70 : vector<8x1xf32>
      %72 = vector.broadcast %50 : vector<8x1xf32> to vector<8x256xf32>
      %73 = arith.subf %46, %72 : vector<8x256xf32>
      %74 = vector.broadcast %71 : vector<8x1xf32> to vector<8x256xf32>
      %75 = arith.mulf %73, %74 : vector<8x256xf32>
      %76 = arith.index_cast %arg1 : i32 to index
      %c0_33 = arith.constant 0 : index
      %c0_34 = arith.constant 0 : index
      %77 = vector.load %arg8[%76, %c0_33, %c0_34] : memref<2x8x256xf32, #tpu.memory_space<vmem>>, vector<1x8x256xf32>
      %78 = vector.shape_cast %77 : vector<1x8x256xf32> to vector<8x256xf32>
      %79 = vector.shape_cast %75 : vector<8x256xf32> to vector<1x8x256xf32>
      tpu.vector_store %arg8[%76, %c0_33, %c0_34], %79 {strides = array<i32>} : memref<2x8x256xf32, #tpu.memory_space<vmem>>, vector<1x8x256xf32>,
    } else {
    }
    %c2_i32_11 = arith.constant 2 : i32
    %29 = arith.cmpi eq, %arg0, %c2_i32_11 : i32
    %30 = arith.extui %29 : i1 to i32
    %c0_i32_12 = arith.constant 0 : i32
    %31 = arith.cmpi ne, %30, %c0_i32_12 : i32
    scf.if %31 {
      %c0_13 = arith.constant 0 : index
      %c0_14 = arith.constant 0 : index
      %c0_15 = arith.constant 0 : index
      %32 = vector.load %arg2[%c0_13, %c0_14, %c0_15] : memref<1x4x256xf32, #tpu.memory_space<vmem>>, vector<1x4x256xf32>
      %33 = vector.shape_cast %32 : vector<1x4x256xf32> to vector<4x256xf32>
      %c0_16 = arith.constant 0 : index
      %c0_17 = arith.constant 0 : index
      %34 = vector.load %arg5[%c0_16, %c0_17] : memref<8x4xf32, #tpu.memory_space<vmem>>, vector<8x4xf32>
      %cst = arith.constant dense<0.000000e+00> : vector<8x256xf32>
      %35 = tpu.matmul %34, %33, %cst {dimension_numbers = #tpu.dot_dimension_numbers<[1], [0], [0], [1], [0, 0, 1, 1], [], []>} : vector<8x4xf32>, vector<4x256xf32>, vector<8x256xf32> -> vector<8x256xf32>
      %36 = vector.broadcast %7 : vector<8x1xf32> to vector<8x256xf32>
      %37 = arith.addf %35, %36 : vector<8x256xf32>
      %38 = arith.index_cast %arg1 : i32 to index
      %c0_18 = arith.constant 0 : index
      %c0_19 = arith.constant 0 : index
      %39 = vector.load %arg8[%38, %c0_18, %c0_19] : memref<2x8x256xf32, #tpu.memory_space<vmem>>, vector<1x8x256xf32>
      %40 = vector.shape_cast %39 : vector<1x8x256xf32> to vector<8x256xf32>
      %c1 = arith.constant 1 : index
      %c0_20 = arith.constant 0 : index
      %c0_21 = arith.constant 0 : index
      %41 = vector.load %arg10[%c1, %c0_20, %c0_21] : memref<2x8x1xf32, #tpu.memory_space<vmem>>, vector<1x8x1xf32>
      %42 = vector.shape_cast %41 : vector<1x8x1xf32> to vector<8x1xf32>
      %43 = vector.broadcast %42 : vector<8x1xf32> to vector<8x256xf32>
      %44 = arith.mulf %40, %43 : vector<8x256xf32>
      %45 = vector.broadcast %6 : vector<8x1xf32> to vector<8x256xf32>
      %46 = arith.addf %44, %45 : vector<8x256xf32>
      %47 = arith.addf %46, %37 : vector<8x256xf32>
      %cst_22 = arith.constant 0.000000e+00 : f32
      %48 = vector.broadcast %cst_22 : f32 to vector<8x256xf32>
      %49 = arith.maximumf %47, %48 : vector<8x256xf32>
      %c0_23 = arith.constant 0 : index
      %c0_24 = arith.constant 0 : index
      %c0_25 = arith.constant 0 : index
      %50 = vector.load %arg7[%c0_23, %c0_24, %c0_25] : memref<1x8x256xf32, #tpu.memory_space<vmem>>, vector<1x8x256xf32>
      %51 = vector.shape_cast %50 : vector<1x8x256xf32> to vector<8x256xf32>
      %52 = vector.shape_cast %49 : vector<8x256xf32> to vector<1x8x256xf32>
      tpu.vector_store %arg7[%c0_23, %c0_24, %c0_25], %52 {strides = array<i32>} : memref<1x8x256xf32, #tpu.memory_space<vmem>>, vector<1x8x256xf32>,
    } else {
    }
    return
  }
  func.func @transform_0(%arg0: i32, %arg1: i32) -> (i32, i32, i32) {
    %c1_i32 = arith.constant 1 : i32
    %0 = arith.cmpi eq, %arg0, %c1_i32 : i32
    %c0_i32 = arith.constant 0 : i32
    %1 = arith.select %0, %c0_i32, %arg1 : i32
    %c0_i32_0 = arith.constant 0 : i32
    %c0_i32_1 = arith.constant 0 : i32
    %c0_i32_2 = arith.constant 0 : i32
    return %1, %c0_i32_0, %c0_i32_1 : i32, i32, i32
  }
  func.func @transform_1(%arg0: i32, %arg1: i32) -> (i32, i32) {
    %c0_i32 = arith.constant 0 : i32
    %c0_i32_0 = arith.constant 0 : i32
    %c0_i32_1 = arith.constant 0 : i32
    return %c0_i32, %c0_i32_0 : i32, i32
  }
  func.func @transform_2(%arg0: i32, %arg1: i32) -> (i32, i32) {
    %c0_i32 = arith.constant 0 : i32
    %c0_i32_0 = arith.constant 0 : i32
    %c0_i32_1 = arith.constant 0 : i32
    return %c0_i32, %c0_i32_0 : i32, i32
  }
  func.func @transform_3(%arg0: i32, %arg1: i32) -> (i32, i32) {
    %c0_i32 = arith.constant 0 : i32
    %c0_i32_0 = arith.constant 0 : i32
    %c0_i32_1 = arith.constant 0 : i32
    return %c0_i32, %c0_i32_0 : i32, i32
  }
  func.func @transform_4(%arg0: i32, %arg1: i32) -> (i32, i32) {
    %c0_i32 = arith.constant 0 : i32
    %c0_i32_0 = arith.constant 0 : i32
    %c0_i32_1 = arith.constant 0 : i32
    return %c0_i32, %c0_i32_0 : i32, i32
  }
  func.func @transform_5(%arg0: i32, %arg1: i32) -> (i32, i32, i32) {
    %c2_i32 = arith.constant 2 : i32
    %0 = arith.cmpi eq, %arg0, %c2_i32 : i32
    %c0_i32 = arith.constant 0 : i32
    %1 = arith.select %0, %arg1, %c0_i32 : i32
    %c0_i32_0 = arith.constant 0 : i32
    %c0_i32_1 = arith.constant 0 : i32
    %c0_i32_2 = arith.constant 0 : i32
    return %1, %c0_i32_0, %c0_i32_1 : i32, i32, i32
  }
}

</mosaic_0001>

<llo_original>
// kernel: tpu_custom_call.1
$region0: #{tpu_custom_call.1}
  #allocation0 [shape = 'u32[]', space=smem, size = 0x4, offset = 0x4, fixed_abs, tag = 'smem constant byte address 0x4 - core index']
  #allocation1 [shape = 'u32[144,128]{1,0:T(1,128)}', space=vmem, size = 0x12000, scoped, tag = 'internal scratch']
  #allocation2 [shape = 'f32[2,8,256]{2,1,0:T(8,128)}', space=vmem, size = 0x4000, scoped, tag = 'scratch operand']
  #allocation3 [shape = 'f32[2,8,1]{2,1,0:T(8,128)}', space=vmem, size = 0x2000, scoped, tag = 'scratch operand']
  #allocation4 [shape = 'f32[2,8,1]{2,1,0:T(8,128)}', space=vmem, size = 0x2000, scoped, tag = 'scratch operand']
  %s0 = inlined_call_operand.vmem [shape: f32[2,4,256], index: 0, kind: input, shape index: {}]
  %s1 = inlined_call_operand.vmem [shape: f32[8,4], index: 1, kind: input, shape index: {}]
  %s2 = inlined_call_operand.vmem [shape: f32[8,8], index: 2, kind: input, shape index: {}]
  %s3 = inlined_call_operand.vmem [shape: f32[8,4], index: 3, kind: input, shape index: {}]
  %s4 = inlined_call_operand.hbm [shape: f32[8,8], index: 4, kind: input, shape index: {}]
  %s5 = inlined_call_operand.hbm [shape: f32[2,8,256], index: 5, kind: output, shape index: {}]
  %s6 = sld [smem:[#allocation0]]
  $region81: #{tpu_custom_call.1} parent=0
    _
  %s8 = ssub.s32 1, %s6
  %s9 = scalar_select 0, %s8, %s6
  $region1: #{tpu_custom_call.1} parent=0
    #allocation5 [shape = 'u8[4096]{0}', space=vmem, size = 0x1000, scoped, tag = 'input window, operand 4, single buffered']
    #allocation6 [shape = 's32[2]{0}', space=sflag, size = 0x8, scoped, tag = 'scoped memory for tpu_custom_call.1']
    #allocation7 [shape = 's32[2]{0}', space=sflag, size = 0x8, scoped, tag = 'scoped memory for tpu_custom_call.1']
    #allocation8 [shape = 'u8[16384]{0}', space=vmem, size = 0x4000, scoped, tag = 'output window, operand 0']
    %10 = vsyncpa [#allocation6], 0
    %11 = vsyncpa [#allocation7], 0
    %s12 = scalar_lea.sflag [#allocation7], 1
    %13 = vsyncpa %s12, 0
    loop: start=0, step=1, limit=8
    $region2: #{tpu_custom_call.1} parent=1 // loop_pre_header
      _
    $region3: #{tpu_custom_call.1} parent=1 // loop_header
      %s15 = sphi 0, %s19
      %p16 = scmp.ge.s32.totalorder %s15, 8
      %s22 = sphi 0, %s34
      %s23 = sphi 0, %s30
      %s24 = sphi 0, %s22
      %s25 = sphi 0, %s23
      %s26 = sphi 0, %s24
      %s27 = sphi 0, %s25
      %s41 = sphi 0, %s43
      %s44 = sphi 0, %s41
      %s45 = sphi 0, %s44
      %s61 = sphi 0, %s45
      %s65 = sphi 0, %s65
      %s67 = sphi 0, %s65
      %s68 = sphi 0, %s67
      %s82 = sphi 0, %s68
      %s86 = sphi 0, %s86
      %s88 = sphi 0, %s86
      %s89 = sphi 0, %s88
      %s103 = sphi 0, %s89
      %s107 = sphi 0, %s107
      %s109 = sphi 0, %s107
      %s110 = sphi 0, %s109
      %s124 = sphi 0, %s110
      %s128 = sphi 0, %s128
      %s130 = sphi 0, %s128
      %s131 = sphi 0, %s130
      %s145 = sphi 0, %s131
      %s155 = sphi 0, %s157
      %s158 = sphi 0, %s155
      %s159 = sphi 0, %s158
      %s175 = sphi 0, %s159
    $region4: #{tpu_custom_call.1} parent=1 // loop_header_branch
      %18 = sbr.rel (%p16) target = $region8
    $region5: #{tpu_custom_call.1} parent=1 // loop_body
      %s20 = ssub.s32 %s15, 1
      %s21 = ssub.s32 %s15, 2
      %s28 = sadd.s32 1, %s23
      %p29 = scmp.ge.s32.totalorder %s28, 2
      %s30 = scalar_select %p29, 0, %s28
      %s31 = sadd.s32 1, %s22
      %s32 = scalar_select %p29, %s31, %s22
      %p33 = scmp.ge.s32.totalorder %s32, 3
      %s34 = scalar_select %p33, 0, %s32
      %p35 = scmp.eq.s32.totalorder %s22, 1
      %s36 = scalar_select %p35, 0, %s23
      %p37 = scmp.eq.s32.totalorder %s34, 1
      %s38 = scalar_select %p37, 0, %s30
      %s39 = ssub.s32 %s36, %s38
      %p40 = scmp.eq.s32.totalorder %s39, 0
      %s42 = sadd.s32 %s41, 1
      %s43 = scalar_select %p40, %s41, %s42
      %p46 = pneg %p40
      %p47 = scmp.eq.s32.totalorder %s15, 5
      %p48 = por %p46, %p47
      %p49 = scmp.ne.s32.totalorder %s41, %s44
      %p50 = scmp.eq.s32.totalorder %s15, 0
      %p51 = por %p49, %p50
      %p52 = scmp.ne.s32.totalorder %s41, %s44
      %p53 = scmp.eq.s32.totalorder %s20, 5
      %p54 = por %p52, %p53
      %p55 = scmp.ne.s32.totalorder %s44, %s45
      %p56 = scmp.eq.s32.totalorder %s20, 0
      %p57 = por %p55, %p56
      %p58 = scmp.ne.s32.totalorder %s44, %s45
      %p59 = scmp.eq.s32.totalorder %s21, 5
      %p60 = por %p58, %p59
      %p62 = scmp.ne.s32.totalorder %s45, %s61
      %p63 = scmp.eq.s32.totalorder %s21, 0
      %p64 = por %p62, %p63
      %s66 = sadd.s32 %s65, 1
      %p69 = scmp.eq.s32.totalorder %s15, 5
      %p70 = scmp.ne.s32.totalorder %s65, %s67
      %p71 = scmp.eq.s32.totalorder %s15, 0
      %p72 = por %p70, %p71
      %p73 = scmp.ne.s32.totalorder %s65, %s67
      %p74 = scmp.eq.s32.totalorder %s20, 5
      %p75 = por %p73, %p74
      %p76 = scmp.ne.s32.totalorder %s67, %s68
      %p77 = scmp.eq.s32.totalorder %s20, 0
      %p78 = por %p76, %p77
      %p79 = scmp.ne.s32.totalorder %s67, %s68
      %p80 = scmp.eq.s32.totalorder %s21, 5
      %p81 = por %p79, %p80
      %p83 = scmp.ne.s32.totalorder %s68, %s82
      %p84 = scmp.eq.s32.totalorder %s21, 0
      %p85 = por %p83, %p84
      %s87 = sadd.s32 %s86, 1
      %p90 = scmp.eq.s32.totalorder %s15, 5
      %p91 = scmp.ne.s32.totalorder %s86, %s88
      %p92 = scmp.eq.s32.totalorder %s15, 0
      %p93 = por %p91, %p92
      %p94 = scmp.ne.s32.totalorder %s86, %s88
      %p95 = scmp.eq.s32.totalorder %s20, 5
      %p96 = por %p94, %p95
      %p97 = scmp.ne.s32.totalorder %s88, %s89
      %p98 = scmp.eq.s32.totalorder %s20, 0
      %p99 = por %p97, %p98
      %p100 = scmp.ne.s32.totalorder %s88, %s89
      %p101 = scmp.eq.s32.totalorder %s21, 5
      %p102 = por %p100, %p101
      %p104 = scmp.ne.s32.totalorder %s89, %s103
      %p105 = scmp.eq.s32.totalorder %s21, 0
      %p106 = por %p104, %p105
      %s108 = sadd.s32 %s107, 1
      %p111 = scmp.eq.s32.totalorder %s15, 5
      %p112 = scmp.ne.s32.totalorder %s107, %s109
      %p113 = scmp.eq.s32.totalorder %s15, 0
      %p114 = por %p112, %p113
      %p115 = scmp.ne.s32.totalorder %s107, %s109
      %p116 = scmp.eq.s32.totalorder %s20, 5
      %p117 = por %p115, %p116
      %p118 = scmp.ne.s32.totalorder %s109, %s110
      %p119 = scmp.eq.s32.totalorder %s20, 0
      %p120 = por %p118, %p119
      %p121 = scmp.ne.s32.totalorder %s109, %s110
      %p122 = scmp.eq.s32.totalorder %s21, 5
      %p123 = por %p121, %p122
      %p125 = scmp.ne.s32.totalorder %s110, %s124
      %p126 = scmp.eq.s32.totalorder %s21, 0
      %p127 = por %p125, %p126
      %s129 = sadd.s32 %s128, 1
      %p132 = scmp.eq.s32.totalorder %s15, 5
      %p133 = scmp.ne.s32.totalorder %s128, %s130
      %p134 = scmp.eq.s32.totalorder %s15, 0
      %p135 = por %p133, %p134
      %p136 = scmp.ne.s32.totalorder %s128, %s130
      %p137 = scmp.eq.s32.totalorder %s20, 5
      %p138 = por %p136, %p137
      %p139 = scmp.ne.s32.totalorder %s130, %s131
      %p140 = scmp.eq.s32.totalorder %s20, 0
      %p141 = por %p139, %p140
      %p142 = scmp.ne.s32.totalorder %s130, %s131
      %p143 = scmp.eq.s32.totalorder %s21, 5
      %p144 = por %p142, %p143
      %p146 = scmp.ne.s32.totalorder %s131, %s145
      %p147 = scmp.eq.s32.totalorder %s21, 0
      %p148 = por %p146, %p147
      %p149 = scmp.eq.s32.totalorder %s22, 2
      %s150 = scalar_select %p149, %s23, 0
      %p151 = scmp.eq.s32.totalorder %s34, 2
      %s152 = scalar_select %p151, %s30, 0
      %s153 = ssub.s32 %s150, %s152
      %p154 = scmp.eq.s32.totalorder %s153, 0
      %s156 = sadd.s32 %s155, 1
      %s157 = scalar_select %p154, %s155, %s156
      %p160 = pneg %p154
      %p161 = scmp.eq.s32.totalorder %s15, 5
      %p162 = por %p160, %p161
      %p163 = scmp.ne.s32.totalorder %s155, %s158
      %p164 = scmp.eq.s32.totalorder %s15, 0
      %p165 = por %p163, %p164
      %p166 = scmp.ne.s32.totalorder %s155, %s158
      %p167 = scmp.eq.s32.totalorder %s20, 5
      %p168 = por %p166, %p167
      %p169 = scmp.ne.s32.totalorder %s158, %s159
      %p170 = scmp.eq.s32.totalorder %s20, 0
      %p171 = por %p169, %p170
      %p172 = scmp.ne.s32.totalorder %s158, %s159
      %p173 = scmp.eq.s32.totalorder %s21, 5
      %p174 = por %p172, %p173
      %p176 = scmp.ne.s32.totalorder %s159, %s175
      %p177 = scmp.eq.s32.totalorder %s21, 0
      %p178 = por %p176, %p177
      %p179 = scmp.le.s32.totalorder 1, %s15
      %p180 = scmp.lt.s32.totalorder %s15, 7
      %p181 = pnand %p179, %p180
      %p182 = pneg %p181
      // Predicated region
      $region9: #{tpu_custom_call.1} parent=5 // pred_check
        _
      $region10: #{tpu_custom_call.1} parent=5 // pred_check_branch
        %184 = sbr.rel (%p181) target = $region12
      $region11: #{tpu_custom_call.1} parent=5 // pred_region
        %s185 = ssub.s32 %s15, 1
        // Predicated region
        $region13: #{tpu_custom_call.1} parent=11 // pred_check
          %p186 = pneg %p78
        $region14: #{tpu_custom_call.1} parent=11 // pred_check_branch
          %188 = sbr.rel (%p186) target = $region16
        $region15: #{tpu_custom_call.1} parent=11 // pred_region
          _
        $region16: #{tpu_custom_call.1} parent=11 // pred_fallthru
          _
        // Predicated region
        $region17: #{tpu_custom_call.1} parent=11 // pred_check
          %p189 = pneg %p99
        $region18: #{tpu_custom_call.1} parent=11 // pred_check_branch
          %191 = sbr.rel (%p189) target = $region20
        $region19: #{tpu_custom_call.1} parent=11 // pred_region
          _
        $region20: #{tpu_custom_call.1} parent=11 // pred_fallthru
          _
        // Predicated region
        $region21: #{tpu_custom_call.1} parent=11 // pred_check
          %p192 = pneg %p120
        $region22: #{tpu_custom_call.1} parent=11 // pred_check_branch
          %194 = sbr.rel (%p192) target = $region24
        $region23: #{tpu_custom_call.1} parent=11 // pred_region
          _
        $region24: #{tpu_custom_call.1} parent=11 // pred_fallthru
          _
        // Predicated region
        $region25: #{tpu_custom_call.1} parent=11 // pred_check
          %p195 = pneg %p141
        $region26: #{tpu_custom_call.1} parent=11 // pred_check_branch
          %197 = sbr.rel (%p195) target = $region28
        $region27: #{tpu_custom_call.1} parent=11 // pred_region
          %s199 = ssub.s32 128, 128
          %200 = vsyncadd [#allocation6], %s199
          %s202 = sshll.u32 [#allocation5], 4
          %s203 = int_to_ptr.vmem [resolvable:$true] %s202
          %205 = dma.hbm_to_vmem [thread:$0]  %s4, 128, %s203, [#allocation6]
        $region28: #{tpu_custom_call.1} parent=11 // pred_fallthru
          _
      $region12: #{tpu_custom_call.1} parent=5 // pred_fallthru
        _
      %p206 = scmp.lt.s32.totalorder %s15, 6
      // Predicated region
      $region29: #{tpu_custom_call.1} parent=5 // pred_check
        %p207 = pneg %p206
      $region30: #{tpu_custom_call.1} parent=5 // pred_check_branch
        %209 = sbr.rel (%p207) target = $region32
      $region31: #{tpu_custom_call.1} parent=5 // pred_region
        // Predicated region
        $region33: #{tpu_custom_call.1} parent=31 // pred_check
          %p210 = pneg %p51
        $region34: #{tpu_custom_call.1} parent=31 // pred_check_branch
          %212 = sbr.rel (%p210) target = $region36
        $region35: #{tpu_custom_call.1} parent=31 // pred_region
          %p213 = scmp.eq.s32.totalorder %s22, 1
          %s214 = scalar_select %p213, 0, %s23
          %p215 = scmp.lt.s32.totalorder %s214, 1
          %s216 = scalar_select %p215, %s214, 1
          %s217 = smul.addr %s216, 2
          %s218 = smul.addr %s217, 4
          %s219 = scalar_lea.vmem %s0, %s218
          %p220 = scmp.eq.s32.totalorder %s22, 1
          %s221 = scalar_select %p220, 0, %s23
        $region36: #{tpu_custom_call.1} parent=31 // pred_fallthru
          _
      $region32: #{tpu_custom_call.1} parent=5 // pred_fallthru
        _
      %p222 = scmp.le.s32.totalorder 1, %s15
      %p223 = scmp.lt.s32.totalorder %s15, 7
      %p224 = pnand %p222, %p223
      %p225 = pneg %p224
      // Predicated region
      $region37: #{tpu_custom_call.1} parent=5 // pred_check
        _
      $region38: #{tpu_custom_call.1} parent=5 // pred_check_branch
        %227 = sbr.rel (%p224) target = $region40
      $region39: #{tpu_custom_call.1} parent=5 // pred_region
        %s228 = ssub.s32 %s15, 1
        // Predicated region
        $region41: #{tpu_custom_call.1} parent=39 // pred_check
          %p229 = pneg %p141
        $region42: #{tpu_custom_call.1} parent=39 // pred_check_branch
          %231 = sbr.rel (%p229) target = $region44
        $region43: #{tpu_custom_call.1} parent=39 // pred_region
          %232 = dma.done [#allocation6], 128
        $region44: #{tpu_custom_call.1} parent=39 // pred_fallthru
          _
        %p233 = scmp.eq.s32.totalorder %s24, 1
        %s234 = scalar_select %p233, 0, %s25
        %p235 = scmp.lt.s32.totalorder %s234, 1
        %s236 = scalar_select %p235, %s234, 1
        %s237 = smul.addr %s236, 2
        %s238 = smul.addr %s237, 4
        %s239 = scalar_lea.vmem %s0, %s238
        %p240 = pneg %p57
        %p241 = pneg %p54
        %p242 = pneg %p78
        %p243 = pneg %p75
        %p244 = pneg %p99
        %p245 = pneg %p96
        %p246 = pneg %p120
        %p247 = pneg %p117
        %p248 = pneg %p141
        %p249 = pneg %p138
        %p250 = pneg %p171
        %p251 = pneg %p168
        %s252 = sand.u32 %s158, 1
        %s253 = scalar_lea.sflag [#allocation7], %s252
        %s254 = sand.u32 %s158, 1
        %s255 = smul.addr %s254, 16
        %s256 = scalar_lea.vmem [#allocation8], %s255
        %p257 = scmp.eq.s32.totalorder %s24, 1
        %s258 = scalar_select %p257, 0, %s25
        %p259 = scmp.lt.s32.totalorder %s258, 1
        %s260 = scalar_select %p259, %s258, 1
        %s261 = smul.addr %s260, 2
        %s262 = smul.addr %s261, 4
        %s263 = scalar_lea.vmem %s0, %s262
        %p264 = scmp.eq.s32.totalorder %s24, 1
        %s265 = scalar_select %p264, 0, %s25
        %p266 = scmp.eq.s32.totalorder %s24, 2
        %s267 = scalar_select %p266, %s25, 0
        %v268 = vld [vmem:[#allocation5] sm:$0xff]
        %p269 = scmp.eq.s32.totalorder %s24, 0
        %p270 = scmp.eq.s32.totalorder %s25, 0
        %p271 = pnand %p269, %p270
        %p272 = pneg %p271
        // Predicated region
        $region45: #{tpu_custom_call.1} parent=39 // pred_check
          _
        $region46: #{tpu_custom_call.1} parent=39 // pred_check_branch
          %274 = sbr.rel (%p271) target = $region48
        $region47: #{tpu_custom_call.1} parent=39 // pred_region
          %vm275 = vcmask 7168
          %276 = vst.msk [vmem:[#allocation3] sm:$0xff] %vm275, 0.0
          %277 = vst.msk [vmem:[#allocation3 + $0x8] sm:$0xff] %vm275, 0.0
        $region48: #{tpu_custom_call.1} parent=39 // pred_fallthru
          _
        %p278 = scmp.eq.s32.totalorder %s24, 1
        %p279 = pnand %p278, %p270
        %p280 = pneg %p279
        // Predicated region
        $region49: #{tpu_custom_call.1} parent=39 // pred_check
          _
        $region50: #{tpu_custom_call.1} parent=39 // pred_check_branch
          %282 = sbr.rel (%p279) target = $region52
        $region51: #{tpu_custom_call.1} parent=39 // pred_region
          %v283 = vld [vmem:[#allocation3] sm:$0xff]
          %v284 = vmul.f32 %v283, 0.5
          %v285 = vadd.f32 %v284, 1e-05
          %v286 = vrsqrt.pop %v285
          %288 = vrot.lane.b32.xlu0 %v268, 127
          %v289 = vpop.permute.xlu0 %288
          %v291 = vmul.f32 %v286, %v289
          %vm292 = vcmask 7168
          %293 = vst.msk [vmem:[#allocation4] sm:$0xff] %vm292, %v291
        $region52: #{tpu_custom_call.1} parent=39 // pred_fallthru
          _
        %p294 = scmp.eq.s32.totalorder %s24, 2
        %p295 = pnand %p294, %p270
        %p296 = pneg %p295
        // Predicated region
        $region53: #{tpu_custom_call.1} parent=39 // pred_check
          _
        $region54: #{tpu_custom_call.1} parent=39 // pred_check_branch
          %298 = sbr.rel (%p295) target = $region56
        $region55: #{tpu_custom_call.1} parent=39 // pred_region
          %s299 = scalar_lea.vmem [#allocation3], 8
          %v300 = vld [vmem:[%s299] sm:$0xff]
          %v301 = vmul.f32 %v300, 0.5
          %v302 = vadd.f32 %v301, 1e-05
          %v303 = vrsqrt.pop %v302
          %305 = vrot.lane.b32.xlu0 %v268, 124
          %v306 = vpop.permute.xlu0 %305
          %v308 = vmul.f32 %v303, %v306
          %s309 = scalar_lea.vmem [#allocation4], 8
          %vm310 = vcmask 7168
          %311 = vst.msk [vmem:[%s309] sm:$0xff] %vm310, %v308
        $region56: #{tpu_custom_call.1} parent=39 // pred_fallthru
          _
        // Predicated region
        $region57: #{tpu_custom_call.1} parent=39 // pred_check
          %p312 = pneg %p269
        $region58: #{tpu_custom_call.1} parent=39 // pred_check_branch
          %314 = sbr.rel (%p312) target = $region60
        $region59: #{tpu_custom_call.1} parent=39 // pred_region
          %v315 = vld [vmem:[%s263] sm:$0xff]
          %v316 = vld [vmem:[%s1] sm:$0xff]
          %318 = vset.pattern.permute.xlu0 0
          %319 = vperm.xlu0 %318, %v268
          %v320 = vpop.permute.xlu0 %319
          %v323 = vcombine.high %v315, %v315
          %vm324 = vcmask 31744
          %v326 = vsel %vm324, %v316, 0
          %vm328 = vcmask 1043456
          %v329 = vsel %vm328, %v315, 0
          %v331 = vsel %vm328, %v323, 0
          %333 = vmatprep.subr.mxu0 0.0
          %334 = vmatpush1.msra.mxu0 0.0
          %335 = vmatprep.subr.mxu0 0.0
          %336 = vmatpush1.msra.mxu0 0.0
          %337 = vmatprep.subr.mxu0 0.0
          %338 = vmatpush1.msra.mxu0 0.0
          %339 = vmatprep.subr.mxu0 0.0
          %340 = vmatpush1.msra.mxu0 0.0
          %341 = vmatprep.subr.mxu0 0.0
          %342 = vmatpush1.msra.mxu0 0.0
          %343 = vmatprep.subr.mxu0 0.0
          %344 = vmatpush1.msra.mxu0 0.0
          %345 = vmatprep.subr.mxu0 0.0
          %346 = vmatpush1.msra.mxu0 0.0
          %347 = vmatprep.subr.mxu0 0.0
          %348 = vmatpush1.msra.mxu0 0.0
          %349 = vmatprep.subr.mxu0 0.0
          %350 = vmatpush1.msra.mxu0 0.0
          %351 = vmatprep.subr.mxu0 0.0
          %352 = vmatpush1.msra.mxu0 0.0
          %353 = vmatprep.subr.mxu0 0.0
          %354 = vmatpush1.msra.mxu0 0.0
          %355 = vmatprep.subr.mxu0 0.0
          %356 = vmatpush1.msra.mxu0 0.0
          %357 = vmatprep.subr.mxu0 0.0
          %358 = vmatpush1.msra.mxu0 0.0
          %359 = vmatprep.subr.mxu0 0.0
          %360 = vmatpush1.msra.mxu0 0.0
          %361 = vmatprep.subr.mxu0 0.0
          %362 = vmatpush1.msra.mxu0 0.0
          %363 = vmatprep.subr.mxu0 %v331
          %364 = vmatpush1.msra.mxu0 %v329
          %365 = vmatprep.subr.mxu0 0.0
          %366 = vmatpush2.msra.mxu0 0.0
          %367 = vmatprep.subr.mxu0 0.0
          %368 = vmatpush2.msra.mxu0 0.0
          %369 = vmatprep.subr.mxu0 0.0
          %370 = vmatpush2.msra.mxu0 0.0
          %371 = vmatprep.subr.mxu0 0.0
          %372 = vmatpush2.msra.mxu0 0.0
          %373 = vmatprep.subr.mxu0 0.0
          %374 = vmatpush2.msra.mxu0 0.0
          %375 = vmatprep.subr.mxu0 0.0
          %376 = vmatpush2.msra.mxu0 0.0
          %377 = vmatprep.subr.mxu0 0.0
          %378 = vmatpush2.msra.mxu0 0.0
          %379 = vmatprep.subr.mxu0 0.0
          %380 = vmatpush2.msra.mxu0 0.0
          %381 = vmatprep.subr.mxu0 0.0
          %382 = vmatpush2.msra.mxu0 0.0
          %383 = vmatprep.subr.mxu0 0.0
          %384 = vmatpush2.msra.mxu0 0.0
          %385 = vmatprep.subr.mxu0 0.0
          %386 = vmatpush2.msra.mxu0 0.0
          %387 = vmatprep.subr.mxu0 0.0
          %388 = vmatpush2.msra.mxu0 0.0
          %389 = vmatprep.subr.mxu0 0.0
          %390 = vmatpush2.msra.mxu0 0.0
          %391 = vmatprep.subr.mxu0 0.0
          %392 = vmatpush2.msra.mxu0 0.0
          %393 = vmatprep.subr.mxu0 0.0
          %394 = vmatpush2.msra.mxu0 0.0
          %395 = vmatprep.subr.mxu0 0.0
          %396 = vmatpush2.msra.mxu0 0.0
          %397 = vmatprep.mubr.f32.mxu0 0.0
          %398 = vmatmul.mubr.f32.gmra.mxu0 %v326
          %v399 = vpop.f32.mrf.mxu0
          %v400 = vadd.f32 %v320, %v399
          %v401 = vpop.f32.mrf.mxu0
          %v402 = vadd.f32 %v320, %v401
          %403 = vdwg.mxu0
          %v404 = vadd.f32 %v400, %v402
          %405 = vadd.xlane.f32.xlu0 %v404
          %v406 = vpop.xlane.xlu0 %405
          %v407 = vmul.f32 %v406, 0.00390625
          %v408 = vmul.f32 %v400, %v400
          %v409 = vmul.f32 %v402, %v402
          %v410 = vadd.f32 %v408, %v409
          %411 = vadd.xlane.f32.xlu0 %v410
          %v412 = vpop.xlane.xlu0 %411
          %v413 = vmul.f32 %v412, 0.00390625
          %v414 = vmul.f32 %v407, %v407
          %v415 = vsub.f32 %v413, %v414
          %v416 = vmax.f32 %v415, 0.0
          %v417 = vld [vmem:[#allocation3] sm:$0xff]
          %v418 = vadd.f32 %v416, 1e-05
          %v419 = vrcp.pop %v418
          %v420 = vmul.f32 %v416, %v419
          %v421 = vadd.f32 %v417, %v420
          %vm422 = vcmask 7168
          %423 = vst.msk [vmem:[#allocation3] sm:$0xff] %vm422, %v421
          %v424 = vrsqrt.pop %v418
          %v425 = vsub.f32 %v400, %v407
          %v426 = vsub.f32 %v402, %v407
          %v427 = vmul.f32 %v425, %v424
          %v428 = vmul.f32 %v426, %v424
          %s429 = smul.u32 %s25, 2
          %s430 = smul.addr %s429, 8
          %s431 = scalar_lea.vmem [#allocation2], %s430
          %432 = vst [vmem:[%s431] sm:$0xff] %v427
          %433 = vst [vmem:[%s431 + $0x8] sm:$0xff] %v428
        $region60: #{tpu_custom_call.1} parent=39 // pred_fallthru
          _
        // Predicated region
        $region61: #{tpu_custom_call.1} parent=39 // pred_check
          %p434 = pneg %p278
        $region62: #{tpu_custom_call.1} parent=39 // pred_check_branch
          %436 = sbr.rel (%p434) target = $region64
        $region63: #{tpu_custom_call.1} parent=39 // pred_region
          %s437 = smul.u32 %s25, 2
          %s438 = smul.addr %s437, 8
          %s439 = scalar_lea.vmem [#allocation2], %s438
          %v440 = vld [vmem:[%s439] sm:$0xff]
          %v441 = vld [vmem:[%s439 + $0x8] sm:$0xff]
          %v442 = vld [vmem:[#allocation4] sm:$0xff]
          %444 = vset.pattern.permute.xlu0 0
          %445 = vperm.xlu0 %444, %v442
          %v446 = vpop.permute.xlu0 %445
          %v448 = vmul.f32 %v440, %v446
          %v449 = vmul.f32 %v441, %v446
          %451 = vset.pattern.permute.xlu0 2
          %452 = vperm.xlu0 %451, %v268
          %v453 = vpop.permute.xlu0 %452
          %v455 = vadd.f32 %v448, %v453
          %v456 = vadd.f32 %v449, %v453
          %v457 = vmax.f32 %v455, 0.0
          %v458 = vmax.f32 %v456, 0.0
          %v459 = vld [vmem:[%s2] sm:$0xff]
          %460 = vset.pattern.permute.xlu0 3
          %461 = vperm.xlu0 %460, %v268
          %v462 = vpop.permute.xlu0 %461
          %vm464 = vcmask 64512
          %v466 = vsel %vm464, %v459, 0
          %468 = vmatprep.subr.mxu0 0.0
          %469 = vmatpush1.msra.mxu0 0.0
          %470 = vmatprep.subr.mxu0 0.0
          %471 = vmatpush1.msra.mxu0 0.0
          %472 = vmatprep.subr.mxu0 0.0
          %473 = vmatpush1.msra.mxu0 0.0
          %474 = vmatprep.subr.mxu0 0.0
          %475 = vmatpush1.msra.mxu0 0.0
          %476 = vmatprep.subr.mxu0 0.0
          %477 = vmatpush1.msra.mxu0 0.0
          %478 = vmatprep.subr.mxu0 0.0
          %479 = vmatpush1.msra.mxu0 0.0
          %480 = vmatprep.subr.mxu0 0.0
          %481 = vmatpush1.msra.mxu0 0.0
          %482 = vmatprep.subr.mxu0 0.0
          %483 = vmatpush1.msra.mxu0 0.0
          %484 = vmatprep.subr.mxu0 0.0
          %485 = vmatpush1.msra.mxu0 0.0
          %486 = vmatprep.subr.mxu0 0.0
          %487 = vmatpush1.msra.mxu0 0.0
          %488 = vmatprep.subr.mxu0 0.0
          %489 = vmatpush1.msra.mxu0 0.0
          %490 = vmatprep.subr.mxu0 0.0
          %491 = vmatpush1.msra.mxu0 0.0
          %492 = vmatprep.subr.mxu0 0.0
          %493 = vmatpush1.msra.mxu0 0.0
          %494 = vmatprep.subr.mxu0 0.0
          %495 = vmatpush1.msra.mxu0 0.0
          %496 = vmatprep.subr.mxu0 0.0
          %497 = vmatpush1.msra.mxu0 0.0
          %498 = vmatprep.subr.mxu0 %v458
          %499 = vmatpush1.msra.mxu0 %v457
          %500 = vmatprep.subr.mxu0 0.0
          %501 = vmatpush2.msra.mxu0 0.0
          %502 = vmatprep.subr.mxu0 0.0
          %503 = vmatpush2.msra.mxu0 0.0
          %504 = vmatprep.subr.mxu0 0.0
          %505 = vmatpush2.msra.mxu0 0.0
          %506 = vmatprep.subr.mxu0 0.0
          %507 = vmatpush2.msra.mxu0 0.0
          %508 = vmatprep.subr.mxu0 0.0
          %509 = vmatpush2.msra.mxu0 0.0
          %510 = vmatprep.subr.mxu0 0.0
          %511 = vmatpush2.msra.mxu0 0.0
          %512 = vmatprep.subr.mxu0 0.0
          %513 = vmatpush2.msra.mxu0 0.0
          %514 = vmatprep.subr.mxu0 0.0
          %515 = vmatpush2.msra.mxu0 0.0
          %516 = vmatprep.subr.mxu0 0.0
          %517 = vmatpush2.msra.mxu0 0.0
          %518 = vmatprep.subr.mxu0 0.0
          %519 = vmatpush2.msra.mxu0 0.0
          %520 = vmatprep.subr.mxu0 0.0
          %521 = vmatpush2.msra.mxu0 0.0
          %522 = vmatprep.subr.mxu0 0.0
          %523 = vmatpush2.msra.mxu0 0.0
          %524 = vmatprep.subr.mxu0 0.0
          %525 = vmatpush2.msra.mxu0 0.0
          %526 = vmatprep.subr.mxu0 0.0
          %527 = vmatpush2.msra.mxu0 0.0
          %528 = vmatprep.subr.mxu0 0.0
          %529 = vmatpush2.msra.mxu0 0.0
          %530 = vmatprep.subr.mxu0 0.0
          %531 = vmatpush2.msra.mxu0 0.0
          %532 = vmatprep.mubr.f32.mxu0 0.0
          %533 = vmatmul.mubr.f32.gmra.mxu0 %v466
          %v534 = vpop.f32.mrf.mxu0
          %v535 = vadd.f32 %v462, %v534
          %v536 = vpop.f32.mrf.mxu0
          %v537 = vadd.f32 %v462, %v536
          %538 = vdwg.mxu0
          %v539 = vadd.f32 %v535, %v537
          %540 = vadd.xlane.f32.xlu0 %v539
          %v541 = vpop.xlane.xlu0 %540
          %v542 = vmul.f32 %v541, 0.00390625
          %v543 = vmul.f32 %v535, %v535
          %v544 = vmul.f32 %v537, %v537
          %v545 = vadd.f32 %v543, %v544
          %546 = vadd.xlane.f32.xlu0 %v545
          %v547 = vpop.xlane.xlu0 %546
          %v548 = vmul.f32 %v547, 0.00390625
          %v549 = vmul.f32 %v542, %v542
          %v550 = vsub.f32 %v548, %v549
          %v551 = vmax.f32 %v550, 0.0
          %s552 = scalar_lea.vmem [#allocation3], 8
          %v553 = vld [vmem:[%s552] sm:$0xff]
          %v554 = vadd.f32 %v551, 1e-05
          %v555 = vrcp.pop %v554
          %v556 = vmul.f32 %v551, %v555
          %v557 = vadd.f32 %v553, %v556
          %vm558 = vcmask 7168
          %559 = vst.msk [vmem:[%s552] sm:$0xff] %vm558, %v557
          %v560 = vrsqrt.pop %v554
          %v561 = vsub.f32 %v535, %v542
          %v562 = vsub.f32 %v537, %v542
          %v563 = vmul.f32 %v561, %v560
          %v564 = vmul.f32 %v562, %v560
          %565 = vst [vmem:[%s439] sm:$0xff] %v563
          %566 = vst [vmem:[%s439 + $0x8] sm:$0xff] %v564
        $region64: #{tpu_custom_call.1} parent=39 // pred_fallthru
          _
        // Predicated region
        $region65: #{tpu_custom_call.1} parent=39 // pred_check
          %p567 = pneg %p294
        $region66: #{tpu_custom_call.1} parent=39 // pred_check_branch
          %569 = sbr.rel (%p567) target = $region68
        $region67: #{tpu_custom_call.1} parent=39 // pred_region
          %v570 = vld [vmem:[%s263] sm:$0xff]
          %v571 = vld [vmem:[%s3] sm:$0xff]
          %573 = vset.pattern.permute.xlu0 6
          %574 = vperm.xlu0 %573, %v268
          %v575 = vpop.permute.xlu0 %574
          %v578 = vcombine.high %v570, %v570
          %vm579 = vcmask 31744
          %v581 = vsel %vm579, %v571, 0
          %vm583 = vcmask 1043456
          %v584 = vsel %vm583, %v570, 0
          %v586 = vsel %vm583, %v578, 0
          %588 = vmatprep.subr.mxu0 0.0
          %589 = vmatpush1.msra.mxu0 0.0
          %590 = vmatprep.subr.mxu0 0.0
          %591 = vmatpush1.msra.mxu0 0.0
          %592 = vmatprep.subr.mxu0 0.0
          %593 = vmatpush1.msra.mxu0 0.0
          %594 = vmatprep.subr.mxu0 0.0
          %595 = vmatpush1.msra.mxu0 0.0
          %596 = vmatprep.subr.mxu0 0.0
          %597 = vmatpush1.msra.mxu0 0.0
          %598 = vmatprep.subr.mxu0 0.0
          %599 = vmatpush1.msra.mxu0 0.0
          %600 = vmatprep.subr.mxu0 0.0
          %601 = vmatpush1.msra.mxu0 0.0
          %602 = vmatprep.subr.mxu0 0.0
          %603 = vmatpush1.msra.mxu0 0.0
          %604 = vmatprep.subr.mxu0 0.0
          %605 = vmatpush1.msra.mxu0 0.0
          %606 = vmatprep.subr.mxu0 0.0
          %607 = vmatpush1.msra.mxu0 0.0
          %608 = vmatprep.subr.mxu0 0.0
          %609 = vmatpush1.msra.mxu0 0.0
          %610 = vmatprep.subr.mxu0 0.0
          %611 = vmatpush1.msra.mxu0 0.0
          %612 = vmatprep.subr.mxu0 0.0
          %613 = vmatpush1.msra.mxu0 0.0
          %614 = vmatprep.subr.mxu0 0.0
          %615 = vmatpush1.msra.mxu0 0.0
          %616 = vmatprep.subr.mxu0 0.0
          %617 = vmatpush1.msra.mxu0 0.0
          %618 = vmatprep.subr.mxu0 %v586
          %619 = vmatpush1.msra.mxu0 %v584
          %620 = vmatprep.subr.mxu0 0.0
          %621 = vmatpush2.msra.mxu0 0.0
          %622 = vmatprep.subr.mxu0 0.0
          %623 = vmatpush2.msra.mxu0 0.0
          %624 = vmatprep.subr.mxu0 0.0
          %625 = vmatpush2.msra.mxu0 0.0
          %626 = vmatprep.subr.mxu0 0.0
          %627 = vmatpush2.msra.mxu0 0.0
          %628 = vmatprep.subr.mxu0 0.0
          %629 = vmatpush2.msra.mxu0 0.0
          %630 = vmatprep.subr.mxu0 0.0
          %631 = vmatpush2.msra.mxu0 0.0
          %632 = vmatprep.subr.mxu0 0.0
          %633 = vmatpush2.msra.mxu0 0.0
          %634 = vmatprep.subr.mxu0 0.0
          %635 = vmatpush2.msra.mxu0 0.0
          %636 = vmatprep.subr.mxu0 0.0
          %637 = vmatpush2.msra.mxu0 0.0
          %638 = vmatprep.subr.mxu0 0.0
          %639 = vmatpush2.msra.mxu0 0.0
          %640 = vmatprep.subr.mxu0 0.0
          %641 = vmatpush2.msra.mxu0 0.0
          %642 = vmatprep.subr.mxu0 0.0
          %643 = vmatpush2.msra.mxu0 0.0
          %644 = vmatprep.subr.mxu0 0.0
          %645 = vmatpush2.msra.mxu0 0.0
          %646 = vmatprep.subr.mxu0 0.0
          %647 = vmatpush2.msra.mxu0 0.0
          %648 = vmatprep.subr.mxu0 0.0
          %649 = vmatpush2.msra.mxu0 0.0
          %650 = vmatprep.subr.mxu0 0.0
          %651 = vmatpush2.msra.mxu0 0.0
          %652 = vmatprep.mubr.f32.mxu0 0.0
          %653 = vmatmul.mubr.f32.gmra.mxu0 %v581
          %v654 = vpop.f32.mrf.mxu0
          %v655 = vadd.f32 %v575, %v654
          %v656 = vpop.f32.mrf.mxu0
          %v657 = vadd.f32 %v575, %v656
          %658 = vdwg.mxu0
          %s659 = smul.u32 %s25, 2
          %s660 = smul.addr %s659, 8
          %s661 = scalar_lea.vmem [#allocation2], %s660
          %v662 = vld [vmem:[%s661] sm:$0xff]
          %v663 = vld [vmem:[%s661 + $0x8] sm:$0xff]
          %s664 = scalar_lea.vmem [#allocation4], 8
          %v665 = vld [vmem:[%s664] sm:$0xff]
          %667 = vset.pattern.permute.xlu0 0
          %668 = vperm.xlu0 %667, %v665
          %v669 = vpop.permute.xlu0 %668
          %v671 = vmul.f32 %v662, %v669
          %v672 = vmul.f32 %v663, %v669
          %673 = vset.pattern.permute.xlu0 5
          %674 = vperm.xlu0 %673, %v268
          %v675 = vpop.permute.xlu0 %674
          %v677 = vadd.f32 %v671, %v675
          %v678 = vadd.f32 %v672, %v675
          %v679 = vadd.f32 %v677, %v655
          %v680 = vadd.f32 %v678, %v657
          %v681 = vmax.f32 %v679, 0.0
          %v682 = vmax.f32 %v680, 0.0
          %683 = vst [vmem:[%s256] sm:$0xff] %v681
          %684 = vst [vmem:[%s256 + $0x8] sm:$0xff] %v682
        $region68: #{tpu_custom_call.1} parent=39 // pred_fallthru
          _
        %s685 = sand.u32 %s158, 1
        %s686 = scalar_lea.sflag [#allocation7], %s685
        %s687 = sand.u32 %s158, 1
        %s688 = smul.addr %s687, 16
        %s689 = scalar_lea.vmem [#allocation8], %s688
        // Predicated region
        $region69: #{tpu_custom_call.1} parent=39 // pred_check
          %p690 = pneg %p168
        $region70: #{tpu_custom_call.1} parent=39 // pred_check_branch
          %692 = sbr.rel (%p690) target = $region72
        $region71: #{tpu_custom_call.1} parent=39 // pred_region
          %p693 = scmp.eq.s32.totalorder %s24, 2
          %s694 = scalar_select %p693, %s25, 0
          %s696 = ssub.s32 256, 256
          %697 = vsyncadd %s686, %s696
          %s698 = smul.addr %s694, 2
          %s699 = smul.addr %s698, 128
          %s700 = scalar_lea.hbm %s5, %s699
          %s702 = sshll.u32 %s689, 4
          %s703 = int_to_ptr.vmem [resolvable:$true] %s702
          %705 = dma.vmem_to_hbm [thread:$0]  %s703, 256, %s700, %s686
        $region72: #{tpu_custom_call.1} parent=39 // pred_fallthru
          _
      $region40: #{tpu_custom_call.1} parent=5 // pred_fallthru
        _
      %p706 = scmp.le.s32.totalorder 2, %s15
      // Predicated region
      $region73: #{tpu_custom_call.1} parent=5 // pred_check
        %p707 = pneg %p706
      $region74: #{tpu_custom_call.1} parent=5 // pred_check_branch
        %709 = sbr.rel (%p707) target = $region76
      $region75: #{tpu_custom_call.1} parent=5 // pred_region
        %s710 = ssub.s32 %s15, 2
        // Predicated region
        $region77: #{tpu_custom_call.1} parent=75 // pred_check
          %p711 = pneg %p174
        $region78: #{tpu_custom_call.1} parent=75 // pred_check_branch
          %713 = sbr.rel (%p711) target = $region80
        $region79: #{tpu_custom_call.1} parent=75 // pred_region
          %s714 = sand.u32 %s159, 1
          %s715 = scalar_lea.sflag [#allocation7], %s714
          %s716 = sand.u32 %s159, 1
          %s717 = smul.addr %s716, 16
          %s718 = scalar_lea.vmem [#allocation8], %s717
          %719 = dma.done %s715, 256
        $region80: #{tpu_custom_call.1} parent=75 // pred_fallthru
          _
      $region76: #{tpu_custom_call.1} parent=5 // pred_fallthru
        _
    $region6: #{tpu_custom_call.1} parent=1 // loop_footer
      %s19 = sadd.s32 1, %s15
    $region7: #{tpu_custom_call.1} parent=1 // loop_footer_branch
      %14 = sbr.rel target = $region3
    $region8: #{tpu_custom_call.1} parent=1 // loop_exit
      _
    %720 = vsyncpa [#allocation6], 1
    %s721 = scalar_lea.sflag [#allocation6], 1
    %722 = vsyncpa %s721, 1
    %723 = vsyncpa [#allocation7], 1
    %s724 = scalar_lea.sflag [#allocation7], 1
    %725 = vsyncpa %s724, 1

</llo_original>
